<compile_context>
chip_gen: v7x
topology: tpu7x:2x2x1
jax: 0.10.0
libtpu: 0.0.40
codegen_flags: <defaults>
</compile_context>

<pallas_src>
import jax
import jax.numpy as jnp
import numpy as np
from jax import lax
from jax.experimental import pallas as pl
from jax.experimental.pallas import tpu as pltpu

EPS = 1e-5        # nn.InstanceNorm3d default eps
NEG_SLOPE = 0.2   # LeakyReLU(0.2)


# ---------------------------------------------------------------------------
# small helpers (trace-time layout plumbing)
# ---------------------------------------------------------------------------
def _row_tile(total, target=512):
    """Largest multiple-of-8 divisor of `total` that is <= target (else full)."""
    best = total
    t = 8
    while t <= min(target, total):
        if total % t == 0:
            best = t
        t += 8
    return best


def _depth_tile(D, H, target_rows=256):
    """Largest divisor TD of D with TD*H <= target_rows (>=1)."""
    td = 1
    for cand in range(1, D + 1):
        if D % cand == 0 and cand * H <= target_rows:
            td = cand
    return td


def _build_conv3_band(w2, W):
    """w2: (3,3,3,Cin,Cout) in (kd,kh,kw,ci,co) order -> banded (9*W*Cin, W*Cout).

    Block (kd,kh) row-range, entry [(wi*Cin+ci), (wo*Cout+co)] = w2[kd,kh,kw,ci,co]
    with wi = wo + kw - 1 (out-of-range wi dropped == zero padding along w)."""
    blocks = []
    for kd in range(3):
        for kh in range(3):
            band = sum(jnp.kron(jnp.eye(W, k=1 - kw, dtype=w2.dtype), w2[kd, kh, kw])
                       for kw in range(3))
            blocks.append(band)
    return jnp.concatenate(blocks, axis=0)


def _finalize_stats(stats, W, C, S):
    """stats: (N, B, 2, W*C) per-tile partial (sum, sumsq) -> (N, 2, W*C) (scale, shift)."""
    N = stats.shape[0]
    sums = stats[:, :, 0, :].reshape(N, -1, W, C).sum(axis=(1, 2))   # (N, C)
    sq = stats[:, :, 1, :].reshape(N, -1, W, C).sum(axis=(1, 2))     # (N, C)
    mean = sums / S
    var = sq / S - mean * mean
    inv = lax.rsqrt(var + EPS)
    scale = jnp.tile(inv, (1, W))                                    # w-major, c-minor lanes
    shift = jnp.tile(-mean * inv, (1, W))
    return jnp.stack([scale, shift], axis=1).astype(jnp.float32)     # (N, 2, W*C)


# ---------------------------------------------------------------------------
# Kernel A: layer1 1x1 conv (block-diag weight, lane-dense) + IN-1 partial stats
# ---------------------------------------------------------------------------
def _conv1x1_stats_kernel(x_ref, w_ref, b_ref, y_ref, stats_ref):
    x = x_ref[0]                                                     # (tile, W*Cin4)
    y = jnp.dot(x, w_ref[...], preferred_element_type=jnp.float32) + b_ref[...]
    y_ref[0] = y.astype(y_ref.dtype)
    stats_ref[0, 0] = jnp.concatenate(
        [jnp.sum(y, axis=0, keepdims=True),
         jnp.sum(y * y, axis=0, keepdims=True)], axis=0)             # (2, W*C)


def _conv1x1_stats(x2, w_bd, b_w, *, row_tile):
    N, R, K = x2.shape
    WC = w_bd.shape[1]
    nblk = R // row_tile
    it = x2.dtype.itemsize
    cost = pl.CostEstimate(
        flops=2 * N * R * K * WC, transcendentals=0,
        bytes_accessed=(N * R * K * it + K * WC * w_bd.dtype.itemsize
                        + N * R * WC * it + N * nblk * 2 * WC * 4 + WC * 4))
    return pl.pallas_call(
        _conv1x1_stats_kernel,
        out_shape=(jax.ShapeDtypeStruct((N, R, WC), x2.dtype),
                   jax.ShapeDtypeStruct((N, nblk, 2, WC), jnp.float32)),
        grid=(N, nblk),
        in_specs=[pl.BlockSpec((1, row_tile, K), lambda n, s: (n, s, 0)),
                  pl.BlockSpec((K, WC), lambda n, s: (0, 0)),
                  pl.BlockSpec((1, WC), lambda n, s: (0, 0))],
        out_specs=(pl.BlockSpec((1, row_tile, WC), lambda n, s: (n, s, 0)),
                   pl.BlockSpec((1, 1, 2, WC), lambda n, s: (n, s, 0, 0))),
        compiler_params=pltpu.CompilerParams(
            dimension_semantics=("parallel", "parallel")),
        cost_estimate=cost,
    )(x2, w_bd, b_w)


# ---------------------------------------------------------------------------
# Kernel B: IN-1 apply + LeakyReLU + 3x3x3 conv (single K=9*W*C matmul over a
#           TD-depth slab) + bias + IN-2 partial stats.
#           Grid = (N, D//TD); thin 1-slab halo streams with clamped index_maps.
# ---------------------------------------------------------------------------
def _prenorm_conv3_stats_kernel(prev_ref, cent_ref, next_ref, norm_ref,
                                w_ref, b_ref, y2_ref, stats_ref):
    t = pl.program_id(1)
    is_first = t == 0
    is_last = t == pl.num_programs(1) - 1

    norm = norm_ref[0]                                               # (2, W*C) f32
    scale, shift = norm[0:1], norm[1:2]

    def prenorm(v):                                                  # (*, W*C) -> f32
        z = v.astype(jnp.float32) * scale + shift
        return jnp.where(z >= 0, z, NEG_SLOPE * z)

    Hh = prev_ref.shape[1]           # rows per depth slab (= H)
    rows = cent_ref.shape[1]         # TD * H
    WC = cent_ref.shape[2]

    # normalize + lrelu; zero the kd-halo slabs at the global depth borders
    # (padding enters *after* norm/act in a prenorm conv) -- jnp.where, not *mask.
    zc = prenorm(cent_ref[0])                                        # (TD*H, WC)
    zp = jnp.where(is_first, 0.0, prenorm(prev_ref[0]))              # (H, WC)
    zn = jnp.where(is_last, 0.0, prenorm(next_ref[0]))               # (H, WC)

    # halo-extended slab: rows 0..H-1 = depth d0-1, then TD slabs, then d0+TD.
    zf = jnp.concatenate([zp, zc, zn], axis=0)                       # ((TD+2)*H, WC)
    nrow = zf.shape[0]
    h_idx = lax.broadcasted_iota(jnp.int32, (nrow, 1), 0) % Hh
    zrow = jnp.zeros((1, WC), jnp.float32)
    # value at (same depth, h-1) / (same depth, h+1); zero across H borders.
    z_up = jnp.where(h_idx == 0, 0.0,
                     jnp.concatenate([zrow, zf[:nrow - 1]], axis=0))
    z_dn = jnp.where(h_idx == Hh - 1, 0.0,
                     jnp.concatenate([zf[1:], zrow], axis=0))

    # 9 taps, kd-major / kh-minor, each an aligned (TD*H, WC) slice; one
    # lane-axis concat (each tap written once, no nested zero-row concats).
    taps = []
    for kd in range(3):
        lo = kd * Hh
        for src in (z_up, zf, z_dn):                                 # kh = 0, 1, 2
            taps.append(src[lo:lo + rows].astype(w_ref.dtype))
    patches = jnp.concatenate(taps, axis=1)                          # (TD*H, 9*W*C)

    out = jnp.dot(patches, w_ref[...],
                  preferred_element_type=jnp.float32) + b_ref[...]   # (TD*H, W*C) f32
    y2_ref[0] = out.astype(y2_ref.dtype)
    stats_ref[0, 0] = jnp.concatenate(
        [jnp.sum(out, axis=0, keepdims=True),
         jnp.sum(out * out, axis=0, keepdims=True)], axis=0)


def _prenorm_conv3x3_stats(y1, norm1, w_band, b_w, *, D, H, TD):
    N, R, WC = y1.shape              # R = D*H
    KK = w_band.shape[0]             # 9*W*C
    T = D // TD
    rows = TD * H

    # block units: halo streams are blocked by H rows (one depth slab), so the
    # returned block index is a depth index; centre stream is blocked by TD*H.
    def prev_idx(n, t):
        return (n, jnp.maximum(t * TD - 1, 0), 0)

    def next_idx(n, t):
        return (n, jnp.minimum((t + 1) * TD, D - 1), 0)

    it = y1.dtype.itemsize
    cost = pl.CostEstimate(
        flops=2 * N * R * KK * WC, transcendentals=0,
        bytes_accessed=(N * R * WC * it * 2 + N * T * 2 * H * WC * it
                        + KK * WC * w_band.dtype.itemsize
                        + N * T * 2 * WC * 4 + N * 2 * WC * 4 + WC * 4))
    return pl.pallas_call(
        _prenorm_conv3_stats_kernel,
        out_shape=(jax.ShapeDtypeStruct((N, R, WC), y1.dtype),
                   jax.ShapeDtypeStruct((N, T, 2, WC), jnp.float32)),
        grid=(N, T),
        in_specs=[pl.BlockSpec((1, H, WC), prev_idx),                 # thin prev halo
                  pl.BlockSpec((1, rows, WC), lambda n, t: (n, t, 0)),  # centre slab
                  pl.BlockSpec((1, H, WC), next_idx),                 # thin next halo
                  pl.BlockSpec((1, 2, WC), lambda n, t: (n, 0, 0)),
                  pl.BlockSpec((KK, WC), lambda n, t: (0, 0)),
                  pl.BlockSpec((1, WC), lambda n, t: (0, 0))],
        out_specs=(pl.BlockSpec((1, rows, WC), lambda n, t: (n, t, 0)),
                   pl.BlockSpec((1, 1, 2, WC), lambda n, t: (n, t, 0, 0))),
        compiler_params=pltpu.CompilerParams(
            dimension_semantics=("parallel", "parallel")),
        cost_estimate=cost,
    )(y1, y1, y1, norm1, w_band, b_w)


# ---------------------------------------------------------------------------
# Kernel C: IN-2 apply + LeakyReLU + layer3 1x1 conv (block-diag) + bias
# ---------------------------------------------------------------------------
def _prenorm_conv1x1_kernel(y_ref, norm_ref, w_ref, b_ref, o_ref):
    norm = norm_ref[0]                                               # (2, W*C) f32
    z = y_ref[0].astype(jnp.float32) * norm[0:1] + norm[1:2]
    z = jnp.where(z >= 0, z, NEG_SLOPE * z)
    out = jnp.dot(z.astype(w_ref.dtype), w_ref[...],
                  preferred_element_type=jnp.float32) + b_ref[...]
    o_ref[0] = out.astype(o_ref.dtype)


def _prenorm_conv1x1(y2, norm2, w_bd, b_w, *, row_tile, out_dt):
    N, R, WC = y2.shape
    nblk = R // row_tile
    cost = pl.CostEstimate(
        flops=2 * N * R * WC * WC, transcendentals=0,
        bytes_accessed=(N * R * WC * y2.dtype.itemsize
                        + WC * WC * w_bd.dtype.itemsize
                        + N * R * WC * jnp.dtype(out_dt).itemsize
                        + N * 2 * WC * 4 + WC * 4))
    return pl.pallas_call(
        _prenorm_conv1x1_kernel,
        out_shape=jax.ShapeDtypeStruct((N, R, WC), out_dt),
        grid=(N, nblk),
        in_specs=[pl.BlockSpec((1, row_tile, WC), lambda n, s: (n, s, 0)),
                  pl.BlockSpec((1, 2, WC), lambda n, s: (n, 0, 0)),
                  pl.BlockSpec((WC, WC), lambda n, s: (0, 0)),
                  pl.BlockSpec((1, WC), lambda n, s: (0, 0))],
        out_specs=pl.BlockSpec((1, row_tile, WC), lambda n, s: (n, s, 0)),
        compiler_params=pltpu.CompilerParams(
            dimension_semantics=("parallel", "parallel")),
        cost_estimate=cost,
    )(y2, norm2, w_bd, b_w)


# ---------------------------------------------------------------------------
# Full forward: fusion_conv3d_prenorm
# ---------------------------------------------------------------------------
def fusion_conv3d_prenorm_forward(x_ncdhw, params):
    """x_ncdhw: (N, in_channel*num_cls, D, H, W), like the PyTorch module."""
    N, Cin4, D, H, W = x_ncdhw.shape
    C = params["w1"].shape[1]
    S = D * H * W
    DH = D * H
    WC = W * C
    KA = W * Cin4

    assert H % 8 == 0 and WC % 128 == 0 and KA % 128 == 0, \
        "lane-dense layout needs H % 8 == 0 and W*C, W*Cin multiples of 128"

    tile = _row_tile(DH, target=512)
    TD = _depth_tile(D, H, target_rows=256)
    # bf16 inter-stage activations only when every row block/offset is 16-aligned
    # (bf16 sublane packing); otherwise fall back to f32 activations.
    use_bf16 = (H % 16 == 0) and (tile % 16 == 0) and ((TD * H) % 16 == 0)
    act_dt = jnp.bfloat16 if use_bf16 else jnp.float32
    out_dt = x_ncdhw.dtype

    # lane-dense weights (built once at trace time; cast to the matmul dtype)
    eyeW = jnp.eye(W, dtype=jnp.float32)
    w1_bd = jnp.kron(eyeW, params["w1"].astype(jnp.float32)).astype(act_dt)      # (W*Cin4, W*C)
    b1_w = jnp.tile(params["b1"].astype(jnp.float32), W)[None]                   # (1, W*C)
    w2_band = _build_conv3_band(params["w2"].astype(jnp.float32), W).astype(act_dt)  # (9*W*C, W*C)
    b2_w = jnp.tile(params["b2"].astype(jnp.float32), W)[None]
    w3_bd = jnp.kron(eyeW, params["w3"].astype(jnp.float32)).astype(act_dt)      # (W*C, W*C)
    b3_w = jnp.tile(params["b3"].astype(jnp.float32), W)[None]

    # NCDHW -> NDHWC -> lane-dense rows=(D*H), lanes=(W*Cin)
    x = jnp.transpose(x_ncdhw, (0, 2, 3, 4, 1)).reshape(N, DH, KA).astype(act_dt)

    # stage 1: layer1 1x1 conv + IN-1 partial statistics (fused)
    y1, stats1 = _conv1x1_stats(x, w1_bd, b1_w, row_tile=tile)
    norm1 = _finalize_stats(stats1, W, C, S)

    # stage 2: IN-1 + lrelu + 3x3x3 conv + bias + IN-2 partial statistics (fused)
    y2, stats2 = _prenorm_conv3x3_stats(y1, norm1, w2_band, b2_w, D=D, H=H, TD=TD)
    norm2 = _finalize_stats(stats2, W, C, S)

    # stage 3: IN-2 + lrelu + layer3 1x1 conv + bias (fused)
    y3 = _prenorm_conv1x1(y2, norm2, w3_bd, b3_w, row_tile=tile, out_dt=out_dt)

    y3 = y3.reshape(N, D, H, W, C)
    return jnp.transpose(y3, (0, 4, 1, 2, 3))                                    # back to NCDHW


# ---------------------------------------------------------------------------
# Pure-JAX reference (for correctness check)
# ---------------------------------------------------------------------------
def _ref_forward(x_ncdhw, params):
    x = jnp.transpose(x_ncdhw, (0, 2, 3, 4, 1))

    def conv(inp, w, b, pad):
        out = lax.conv_general_dilated(
            inp, w, window_strides=(1, 1, 1), padding=[(pad, pad)] * 3,
            dimension_numbers=("NDHWC", "DHWIO", "NDHWC"))
        return out + b

    def prenorm(inp):
        mean = jnp.mean(inp, axis=(1, 2, 3), keepdims=True)
        var = jnp.mean(jnp.square(inp - mean), axis=(1, 2, 3), keepdims=True)
        y = (inp - mean) / jnp.sqrt(var + EPS)
        return jnp.where(y >= 0, y, NEG_SLOPE * y)

    w1 = params["w1"].reshape(1, 1, 1, *params["w1"].shape)
    w3 = params["w3"].reshape(1, 1, 1, *params["w3"].shape)
    y = conv(x, w1, params["b1"], 0)
    y = conv(prenorm(y), params["w2"], params["b2"], 1)
    y = conv(prenorm(y), w3, params["b3"], 0)
    return jnp.transpose(y, (0, 4, 1, 2, 3))


if __name__ == "__main__":
    # Small config consistent with the module: in_channel=32, num_cls=4.
    N, C, num_cls = 2, 32, 4
    D, H, W = 8, 16, 8
    Cin4 = C * num_cls

    key = jax.random.PRNGKey(0)
    kx, k1, k2, k3, k4, k5, k6 = jax.random.split(key, 7)

    params = {
        "w1": jax.random.normal(k1, (Cin4, C), jnp.float32) * 0.05,
        "b1": jax.random.normal(k2, (C,), jnp.float32) * 0.05,
        "w2": jax.random.normal(k3, (3, 3, 3, C, C), jnp.float32) * 0.05,
        "b2": jax.random.normal(k4, (C,), jnp.float32) * 0.05,
        "w3": jax.random.normal(k5, (C, C), jnp.float32) * 0.05,
        "b3": jax.random.normal(k6, (C,), jnp.float32) * 0.05,
    }

    x = jax.random.normal(kx, (N, Cin4, D, H, W), jnp.float32)

    out = jax.block_until_ready(jax.jit(fusion_conv3d_prenorm_forward)(x, params))
    ref = jax.block_until_ready(_ref_forward(x, params))

    assert out.shape == (N, C, D, H, W), out.shape
    # bf16 inter-stage activations / weights (f32 accumulation + f32 stats)
    np.testing.assert_allclose(np.asarray(out), np.asarray(ref),
                               rtol=3e-2, atol=3e-2)
    print("KERNEL_OK")
</pallas_src>

<mosaic_0001>
module attributes {stable_mosaic.version = 11 : i64} {
  func.func @_conv1x1_stats_kernel(%arg0: i32, %arg1: i32, %arg2: memref<1x128x1024xbf16, #tpu.memory_space<vmem>>, %arg3: memref<1024x256xbf16, #tpu.memory_space<vmem>>, %arg4: memref<1x256xf32, #tpu.memory_space<vmem>>, %arg5: memref<1x128x256xbf16, #tpu.memory_space<vmem>>, %arg6: memref<1x1x2x256xf32, #tpu.memory_space<vmem>>) attributes {dimension_semantics = [#tpu.dimension_semantics<parallel>, #tpu.dimension_semantics<parallel>], iteration_bounds = array<i64: 2, 1>, scalar_prefetch = 0 : i64, scratch_operands = 0 : i64, tpu.core_type = #tpu.core_type<tc>, window_params = [{transform_indices = @transform_0, window_bounds = array<i64: 1, 128, 1024>}, {pipeline_mode = #tpu.pipeline_mode<synchronous>, transform_indices = @transform_1, window_bounds = array<i64: 1024, 256>}, {pipeline_mode = #tpu.pipeline_mode<synchronous>, transform_indices = @transform_2, window_bounds = array<i64: 1, 256>}, {transform_indices = @transform_3, window_bounds = array<i64: 1, 128, 256>}, {transform_indices = @transform_4, window_bounds = array<i64: 1, 1, 2, 256>}]} {
    %c0 = arith.constant 0 : index
    %c0_0 = arith.constant 0 : index
    %c0_1 = arith.constant 0 : index
    %0 = vector.load %arg2[%c0, %c0_0, %c0_1] : memref<1x128x1024xbf16, #tpu.memory_space<vmem>>, vector<1x128x1024xbf16>
    %1 = vector.shape_cast %0 : vector<1x128x1024xbf16> to vector<128x1024xbf16>
    %c0_2 = arith.constant 0 : index
    %c0_3 = arith.constant 0 : index
    %2 = vector.load %arg3[%c0_2, %c0_3] : memref<1024x256xbf16, #tpu.memory_space<vmem>>, vector<1024x256xbf16>
    %cst = arith.constant dense<0.000000e+00> : vector<128x256xf32>
    %3 = tpu.matmul %1, %2, %cst {dimension_numbers = #tpu.dot_dimension_numbers<[1], [0], [0], [1], [0, 0, 1, 1], [], []>} : vector<128x1024xbf16>, vector<1024x256xbf16>, vector<128x256xf32> -> vector<128x256xf32>
    %c0_4 = arith.constant 0 : index
    %c0_5 = arith.constant 0 : index
    %4 = vector.load %arg4[%c0_4, %c0_5] : memref<1x256xf32, #tpu.memory_space<vmem>>, vector<1x256xf32>
    %5 = vector.broadcast %4 : vector<1x256xf32> to vector<128x256xf32>
    %6 = arith.addf %3, %5 : vector<128x256xf32>
    %7 = arith.truncf %6 : vector<128x256xf32> to vector<128x256xbf16>
    %c0_6 = arith.constant 0 : index
    %c0_7 = arith.constant 0 : index
    %c0_8 = arith.constant 0 : index
    %8 = vector.load %arg5[%c0_6, %c0_7, %c0_8] : memref<1x128x256xbf16, #tpu.memory_space<vmem>>, vector<1x128x256xbf16>
    %9 = vector.shape_cast %8 : vector<1x128x256xbf16> to vector<128x256xbf16>
    %10 = vector.shape_cast %7 : vector<128x256xbf16> to vector<1x128x256xbf16>
    tpu.vector_store %arg5[%c0_6, %c0_7, %c0_8], %10 {strides = array<i32>} : memref<1x128x256xbf16, #tpu.memory_space<vmem>>, vector<1x128x256xbf16>,
    %cst_9 = arith.constant dense<0.000000e+00> : vector<256xf32>
    %11 = vector.multi_reduction <add>, %6, %cst_9 [0] : vector<128x256xf32> to vector<256xf32>
    %12 = vector.shape_cast %11 : vector<256xf32> to vector<1x256xf32>
    %13 = arith.mulf %6, %6 : vector<128x256xf32>
    %cst_10 = arith.constant dense<0.000000e+00> : vector<256xf32>
    %14 = vector.multi_reduction <add>, %13, %cst_10 [0] : vector<128x256xf32> to vector<256xf32>
    %15 = vector.shape_cast %14 : vector<256xf32> to vector<1x256xf32>
    %16 = tpu.concatenate %12, %15 in 0 : vector<1x256xf32>, vector<1x256xf32> -> vector<2x256xf32>
    %c0_11 = arith.constant 0 : index
    %c0_12 = arith.constant 0 : index
    %c0_13 = arith.constant 0 : index
    %c0_14 = arith.constant 0 : index
    %17 = vector.load %arg6[%c0_11, %c0_12, %c0_13, %c0_14] : memref<1x1x2x256xf32, #tpu.memory_space<vmem>>, vector<1x1x2x256xf32>
    %18 = vector.shape_cast %17 : vector<1x1x2x256xf32> to vector<2x256xf32>
    %19 = vector.shape_cast %16 : vector<2x256xf32> to vector<1x1x2x256xf32>
    tpu.vector_store %arg6[%c0_11, %c0_12, %c0_13, %c0_14], %19 {strides = array<i32>} : memref<1x1x2x256xf32, #tpu.memory_space<vmem>>, vector<1x1x2x256xf32>,
    return
  }
  func.func @transform_0(%arg0: i32, %arg1: i32) -> (i32, i32, i32) {
    %c0_i32 = arith.constant 0 : i32
    %c0_i32_0 = arith.constant 0 : i32
    return %arg0, %arg1, %c0_i32 : i32, i32, i32
  }
  func.func @transform_1(%arg0: i32, %arg1: i32) -> (i32, i32) {
    %c0_i32 = arith.constant 0 : i32
    %c0_i32_0 = arith.constant 0 : i32
    %c0_i32_1 = arith.constant 0 : i32
    return %c0_i32, %c0_i32_0 : i32, i32
  }
  func.func @transform_2(%arg0: i32, %arg1: i32) -> (i32, i32) {
    %c0_i32 = arith.constant 0 : i32
    %c0_i32_0 = arith.constant 0 : i32
    %c0_i32_1 = arith.constant 0 : i32
    return %c0_i32, %c0_i32_0 : i32, i32
  }
  func.func @transform_3(%arg0: i32, %arg1: i32) -> (i32, i32, i32) {
    %c0_i32 = arith.constant 0 : i32
    %c0_i32_0 = arith.constant 0 : i32
    return %arg0, %arg1, %c0_i32 : i32, i32, i32
  }
  func.func @transform_4(%arg0: i32, %arg1: i32) -> (i32, i32, i32, i32) {
    %c0_i32 = arith.constant 0 : i32
    %c0_i32_0 = arith.constant 0 : i32
    %c0_i32_1 = arith.constant 0 : i32
    return %arg0, %arg1, %c0_i32, %c0_i32_0 : i32, i32, i32, i32
  }
}

module attributes {stable_mosaic.version = 11 : i64} {
  func.func @_prenorm_conv1x1_kernel(%arg0: i32, %arg1: i32, %arg2: memref<1x128x256xbf16, #tpu.memory_space<vmem>>, %arg3: memref<1x2x256xf32, #tpu.memory_space<vmem>>, %arg4: memref<256x256xbf16, #tpu.memory_space<vmem>>, %arg5: memref<1x256xf32, #tpu.memory_space<vmem>>, %arg6: memref<1x128x256xf32, #tpu.memory_space<vmem>>) attributes {dimension_semantics = [#tpu.dimension_semantics<parallel>, #tpu.dimension_semantics<parallel>], iteration_bounds = array<i64: 2, 1>, scalar_prefetch = 0 : i64, scratch_operands = 0 : i64, tpu.core_type = #tpu.core_type<tc>, window_params = [{transform_indices = @transform_0, window_bounds = array<i64: 1, 128, 256>}, {transform_indices = @transform_1, window_bounds = array<i64: 1, 2, 256>}, {pipeline_mode = #tpu.pipeline_mode<synchronous>, transform_indices = @transform_2, window_bounds = array<i64: 256, 256>}, {pipeline_mode = #tpu.pipeline_mode<synchronous>, transform_indices = @transform_3, window_bounds = array<i64: 1, 256>}, {transform_indices = @transform_4, window_bounds = array<i64: 1, 128, 256>}]} {
    %c0 = arith.constant 0 : index
    %c0_0 = arith.constant 0 : index
    %c0_1 = arith.constant 0 : index
    %0 = vector.load %arg3[%c0, %c0_0, %c0_1] : memref<1x2x256xf32, #tpu.memory_space<vmem>>, vector<1x2x256xf32>
    %1 = vector.shape_cast %0 : vector<1x2x256xf32> to vector<2x256xf32>
    %c0_2 = arith.constant 0 : index
    %c0_3 = arith.constant 0 : index
    %c0_4 = arith.constant 0 : index
    %2 = vector.load %arg2[%c0_2, %c0_3, %c0_4] : memref<1x128x256xbf16, #tpu.memory_space<vmem>>, vector<1x128x256xbf16>
    %3 = vector.shape_cast %2 : vector<1x128x256xbf16> to vector<128x256xbf16>
    %4 = arith.extf %3 : vector<128x256xbf16> to vector<128x256xf32>
    %5 = vector.extract_strided_slice %1 {offsets = [0, 0], sizes = [1, 256], strides = [1, 1]} : vector<2x256xf32> to vector<1x256xf32>
    %6 = vector.broadcast %5 : vector<1x256xf32> to vector<128x256xf32>
    %7 = arith.mulf %4, %6 : vector<128x256xf32>
    %8 = vector.extract_strided_slice %1 {offsets = [1, 0], sizes = [1, 256], strides = [1, 1]} : vector<2x256xf32> to vector<1x256xf32>
    %9 = vector.broadcast %8 : vector<1x256xf32> to vector<128x256xf32>
    %10 = arith.addf %7, %9 : vector<128x256xf32>
    %cst = arith.constant 0.000000e+00 : f32
    %11 = vector.broadcast %cst : f32 to vector<128x256xf32>
    %12 = arith.cmpf oge, %10, %11 : vector<128x256xf32>
    %cst_5 = arith.constant 2.000000e-01 : f32
    %13 = vector.broadcast %cst_5 : f32 to vector<128x256xf32>
    %14 = arith.mulf %13, %10 : vector<128x256xf32>
    %15 = arith.select %12, %10, %14 : vector<128x256xi1>, vector<128x256xf32>
    %16 = arith.truncf %15 : vector<128x256xf32> to vector<128x256xbf16>
    %c0_6 = arith.constant 0 : index
    %c0_7 = arith.constant 0 : index
    %17 = vector.load %arg4[%c0_6, %c0_7] : memref<256x256xbf16, #tpu.memory_space<vmem>>, vector<256x256xbf16>
    %cst_8 = arith.constant dense<0.000000e+00> : vector<128x256xf32>
    %18 = tpu.matmul %16, %17, %cst_8 {dimension_numbers = #tpu.dot_dimension_numbers<[1], [0], [0], [1], [0, 0, 1, 1], [], []>} : vector<128x256xbf16>, vector<256x256xbf16>, vector<128x256xf32> -> vector<128x256xf32>
    %c0_9 = arith.constant 0 : index
    %c0_10 = arith.constant 0 : index
    %19 = vector.load %arg5[%c0_9, %c0_10] : memref<1x256xf32, #tpu.memory_space<vmem>>, vector<1x256xf32>
    %20 = vector.broadcast %19 : vector<1x256xf32> to vector<128x256xf32>
    %21 = arith.addf %18, %20 : vector<128x256xf32>
    %c0_11 = arith.constant 0 : index
    %c0_12 = arith.constant 0 : index
    %c0_13 = arith.constant 0 : index
    %22 = vector.load %arg6[%c0_11, %c0_12, %c0_13] : memref<1x128x256xf32, #tpu.memory_space<vmem>>, vector<1x128x256xf32>
    %23 = vector.shape_cast %22 : vector<1x128x256xf32> to vector<128x256xf32>
    %24 = vector.shape_cast %21 : vector<128x256xf32> to vector<1x128x256xf32>
    tpu.vector_store %arg6[%c0_11, %c0_12, %c0_13], %24 {strides = array<i32>} : memref<1x128x256xf32, #tpu.memory_space<vmem>>, vector<1x128x256xf32>,
    return
  }
  func.func @transform_0(%arg0: i32, %arg1: i32) -> (i32, i32, i32) {
    %c0_i32 = arith.constant 0 : i32
    %c0_i32_0 = arith.constant 0 : i32
    return %arg0, %arg1, %c0_i32 : i32, i32, i32
  }
  func.func @transform_1(%arg0: i32, %arg1: i32) -> (i32, i32, i32) {
    %c0_i32 = arith.constant 0 : i32
    %c0_i32_0 = arith.constant 0 : i32
    %c0_i32_1 = arith.constant 0 : i32
    return %arg0, %c0_i32, %c0_i32_0 : i32, i32, i32
  }
  func.func @transform_2(%arg0: i32, %arg1: i32) -> (i32, i32) {
    %c0_i32 = arith.constant 0 : i32
    %c0_i32_0 = arith.constant 0 : i32
    %c0_i32_1 = arith.constant 0 : i32
    return %c0_i32, %c0_i32_0 : i32, i32
  }
  func.func @transform_3(%arg0: i32, %arg1: i32) -> (i32, i32) {
    %c0_i32 = arith.constant 0 : i32
    %c0_i32_0 = arith.constant 0 : i32
    %c0_i32_1 = arith.constant 0 : i32
    return %c0_i32, %c0_i32_0 : i32, i32
  }
  func.func @transform_4(%arg0: i32, %arg1: i32) -> (i32, i32, i32) {
    %c0_i32 = arith.constant 0 : i32
    %c0_i32_0 = arith.constant 0 : i32
    return %arg0, %arg1, %c0_i32 : i32, i32, i32
  }
}

module attributes {stable_mosaic.version = 11 : i64} {
  func.func @_prenorm_conv3_stats_kernel(%arg0: i32, %arg1: i32, %arg2: memref<1x16x256xbf16, #tpu.memory_space<vmem>>, %arg3: memref<1x128x256xbf16, #tpu.memory_space<vmem>>, %arg4: memref<1x16x256xbf16, #tpu.memory_space<vmem>>, %arg5: memref<1x2x256xf32, #tpu.memory_space<vmem>>, %arg6: memref<2304x256xbf16, #tpu.memory_space<vmem>>, %arg7: memref<1x256xf32, #tpu.memory_space<vmem>>, %arg8: memref<1x128x256xbf16, #tpu.memory_space<vmem>>, %arg9: memref<1x1x2x256xf32, #tpu.memory_space<vmem>>) attributes {dimension_semantics = [#tpu.dimension_semantics<parallel>, #tpu.dimension_semantics<parallel>], iteration_bounds = array<i64: 2, 1>, scalar_prefetch = 0 : i64, scratch_operands = 0 : i64, tpu.core_type = #tpu.core_type<tc>, window_params = [{transform_indices = @transform_0, window_bounds = array<i64: 1, 16, 256>}, {transform_indices = @transform_1, window_bounds = array<i64: 1, 128, 256>}, {transform_indices = @transform_2, window_bounds = array<i64: 1, 16, 256>}, {transform_indices = @transform_3, window_bounds = array<i64: 1, 2, 256>}, {pipeline_mode = #tpu.pipeline_mode<synchronous>, transform_indices = @transform_4, window_bounds = array<i64: 2304, 256>}, {pipeline_mode = #tpu.pipeline_mode<synchronous>, transform_indices = @transform_5, window_bounds = array<i64: 1, 256>}, {transform_indices = @transform_6, window_bounds = array<i64: 1, 128, 256>}, {transform_indices = @transform_7, window_bounds = array<i64: 1, 1, 2, 256>}]} {
    %c0_i32 = arith.constant 0 : i32
    %0 = arith.cmpi eq, %arg1, %c0_i32 : i32
    %c0_i32_0 = arith.constant 0 : i32
    %1 = arith.cmpi eq, %arg1, %c0_i32_0 : i32
    %c0 = arith.constant 0 : index
    %c0_1 = arith.constant 0 : index
    %c0_2 = arith.constant 0 : index
    %2 = vector.load %arg5[%c0, %c0_1, %c0_2] : memref<1x2x256xf32, #tpu.memory_space<vmem>>, vector<1x2x256xf32>
    %3 = vector.shape_cast %2 : vector<1x2x256xf32> to vector<2x256xf32>
    %4 = vector.extract_strided_slice %3 {offsets = [0, 0], sizes = [1, 256], strides = [1, 1]} : vector<2x256xf32> to vector<1x256xf32>
    %5 = vector.extract_strided_slice %3 {offsets = [1, 0], sizes = [1, 256], strides = [1, 1]} : vector<2x256xf32> to vector<1x256xf32>
    %c0_3 = arith.constant 0 : index
    %c0_4 = arith.constant 0 : index
    %c0_5 = arith.constant 0 : index
    %6 = vector.load %arg3[%c0_3, %c0_4, %c0_5] : memref<1x128x256xbf16, #tpu.memory_space<vmem>>, vector<1x128x256xbf16>
    %7 = vector.shape_cast %6 : vector<1x128x256xbf16> to vector<128x256xbf16>
    %8 = arith.extf %7 : vector<128x256xbf16> to vector<128x256xf32>
    %9 = vector.broadcast %4 : vector<1x256xf32> to vector<128x256xf32>
    %10 = arith.mulf %8, %9 : vector<128x256xf32>
    %11 = vector.broadcast %5 : vector<1x256xf32> to vector<128x256xf32>
    %12 = arith.addf %10, %11 : vector<128x256xf32>
    %cst = arith.constant 0.000000e+00 : f32
    %13 = vector.broadcast %cst : f32 to vector<128x256xf32>
    %14 = arith.cmpf oge, %12, %13 : vector<128x256xf32>
    %cst_6 = arith.constant 2.000000e-01 : f32
    %15 = vector.broadcast %cst_6 : f32 to vector<128x256xf32>
    %16 = arith.mulf %15, %12 : vector<128x256xf32>
    %17 = arith.select %14, %12, %16 : vector<128x256xi1>, vector<128x256xf32>
    %c0_7 = arith.constant 0 : index
    %c0_8 = arith.constant 0 : index
    %c0_9 = arith.constant 0 : index
    %18 = vector.load %arg2[%c0_7, %c0_8, %c0_9] : memref<1x16x256xbf16, #tpu.memory_space<vmem>>, vector<1x16x256xbf16>
    %19 = vector.shape_cast %18 : vector<1x16x256xbf16> to vector<16x256xbf16>
    %20 = arith.extf %19 : vector<16x256xbf16> to vector<16x256xf32>
    %21 = vector.broadcast %4 : vector<1x256xf32> to vector<16x256xf32>
    %22 = arith.mulf %20, %21 : vector<16x256xf32>
    %23 = vector.broadcast %5 : vector<1x256xf32> to vector<16x256xf32>
    %24 = arith.addf %22, %23 : vector<16x256xf32>
    %cst_10 = arith.constant 0.000000e+00 : f32
    %25 = vector.broadcast %cst_10 : f32 to vector<16x256xf32>
    %26 = arith.cmpf oge, %24, %25 : vector<16x256xf32>
    %cst_11 = arith.constant 2.000000e-01 : f32
    %27 = vector.broadcast %cst_11 : f32 to vector<16x256xf32>
    %28 = arith.mulf %27, %24 : vector<16x256xf32>
    %29 = arith.select %26, %24, %28 : vector<16x256xi1>, vector<16x256xf32>
    %cst_12 = arith.constant 0.000000e+00 : f32
    %30 = vector.broadcast %cst_12 : f32 to vector<16x256xf32>
    %31 = arith.select %0, %30, %29 : vector<16x256xf32>
    %c0_13 = arith.constant 0 : index
    %c0_14 = arith.constant 0 : index
    %c0_15 = arith.constant 0 : index
    %32 = vector.load %arg4[%c0_13, %c0_14, %c0_15] : memref<1x16x256xbf16, #tpu.memory_space<vmem>>, vector<1x16x256xbf16>
    %33 = vector.shape_cast %32 : vector<1x16x256xbf16> to vector<16x256xbf16>
    %34 = arith.extf %33 : vector<16x256xbf16> to vector<16x256xf32>
    %35 = vector.broadcast %4 : vector<1x256xf32> to vector<16x256xf32>
    %36 = arith.mulf %34, %35 : vector<16x256xf32>
    %37 = vector.broadcast %5 : vector<1x256xf32> to vector<16x256xf32>
    %38 = arith.addf %36, %37 : vector<16x256xf32>
    %cst_16 = arith.constant 0.000000e+00 : f32
    %39 = vector.broadcast %cst_16 : f32 to vector<16x256xf32>
    %40 = arith.cmpf oge, %38, %39 : vector<16x256xf32>
    %cst_17 = arith.constant 2.000000e-01 : f32
    %41 = vector.broadcast %cst_17 : f32 to vector<16x256xf32>
    %42 = arith.mulf %41, %38 : vector<16x256xf32>
    %43 = arith.select %40, %38, %42 : vector<16x256xi1>, vector<16x256xf32>
    %cst_18 = arith.constant 0.000000e+00 : f32
    %44 = vector.broadcast %cst_18 : f32 to vector<16x256xf32>
    %45 = arith.select %1, %44, %43 : vector<16x256xf32>
    %46 = tpu.concatenate %31, %17, %45 in 0 : vector<16x256xf32>, vector<128x256xf32>, vector<16x256xf32> -> vector<160x256xf32>
    %47 = tpu.iota {dimensions = array<i32: 0>} : vector<160x1xi32>
    %c16_i32 = arith.constant 16 : i32
    %c0_i32_19 = arith.constant 0 : i32
    %48 = arith.cmpi eq, %c16_i32, %c0_i32_19 : i32
    %c1_i32 = arith.constant 1 : i32
    %49 = arith.select %48, %c1_i32, %c16_i32 : i32
    %50 = vector.broadcast %49 : i32 to vector<160x1xi32>
    %51 = arith.remsi %47, %50 : vector<160x1xi32>
    %c0_i32_20 = arith.constant 0 : i32
    %52 = vector.broadcast %c0_i32_20 : i32 to vector<160x1xi32>
    %53 = arith.cmpi ne, %51, %52 : vector<160x1xi32>
    %c0_i32_21 = arith.constant 0 : i32
    %54 = vector.broadcast %c0_i32_21 : i32 to vector<160x1xi32>
    %55 = arith.cmpi slt, %51, %54 : vector<160x1xi32>
    %c0_i32_22 = arith.constant 0 : i32
    %56 = arith.cmpi slt, %49, %c0_i32_22 : i32
    %57 = vector.broadcast %56 : i1 to vector<160x1xi1>
    %58 = vector.broadcast %57 : vector<160x1xi1> to vector<160x1xi1>
    %59 = arith.xori %55, %58 : vector<160x1xi1>
    %60 = arith.andi %59, %53 : vector<160x1xi1>
    %61 = vector.broadcast %49 : i32 to vector<160x1xi32>
    %62 = arith.addi %51, %61 : vector<160x1xi32>
    %63 = arith.select %60, %62, %51 : vector<160x1xi1>, vector<160x1xi32>
    %cst_23 = arith.constant 0.000000e+00 : f32
    %64 = vector.broadcast %cst_23 : f32 to vector<1x256xf32>
    %c0_i32_24 = arith.constant 0 : i32
    %65 = vector.broadcast %c0_i32_24 : i32 to vector<160x1xi32>
    %66 = arith.cmpi eq, %63, %65 : vector<160x1xi32>
    %67 = vector.extract_strided_slice %46 {offsets = [0, 0], sizes = [159, 256], strides = [1, 1]} : vector<160x256xf32> to vector<159x256xf32>
    %68 = tpu.concatenate %64, %67 in 0 : vector<1x256xf32>, vector<159x256xf32> -> vector<160x256xf32>
    %cst_25 = arith.constant 0.000000e+00 : f32
    %69 = vector.shape_cast %66 : vector<160x1xi1> to vector<160x1xi1>
    %70 = vector.broadcast %69 : vector<160x1xi1> to vector<160x256xi1>
    %71 = vector.broadcast %cst_25 : f32 to vector<160x256xf32>
    %72 = arith.select %70, %71, %68 : vector<160x256xi1>, vector<160x256xf32>
    %c15_i32 = arith.constant 15 : i32
    %73 = vector.broadcast %c15_i32 : i32 to vector<160x1xi32>
    %74 = arith.cmpi eq, %63, %73 : vector<160x1xi32>
    %75 = vector.extract_strided_slice %46 {offsets = [1, 0], sizes = [159, 256], strides = [1, 1]} : vector<160x256xf32> to vector<159x256xf32>
    %76 = tpu.concatenate %75, %64 in 0 : vector<159x256xf32>, vector<1x256xf32> -> vector<160x256xf32>
    %cst_26 = arith.constant 0.000000e+00 : f32
    %77 = vector.shape_cast %74 : vector<160x1xi1> to vector<160x1xi1>
    %78 = vector.broadcast %77 : vector<160x1xi1> to vector<160x256xi1>
    %79 = vector.broadcast %cst_26 : f32 to vector<160x256xf32>
    %80 = arith.select %78, %79, %76 : vector<160x256xi1>, vector<160x256xf32>
    %81 = vector.extract_strided_slice %72 {offsets = [0, 0], sizes = [128, 256], strides = [1, 1]} : vector<160x256xf32> to vector<128x256xf32>
    %82 = arith.truncf %81 : vector<128x256xf32> to vector<128x256xbf16>
    %83 = vector.extract_strided_slice %46 {offsets = [0, 0], sizes = [128, 256], strides = [1, 1]} : vector<160x256xf32> to vector<128x256xf32>
    %84 = arith.truncf %83 : vector<128x256xf32> to vector<128x256xbf16>
    %85 = vector.extract_strided_slice %80 {offsets = [0, 0], sizes = [128, 256], strides = [1, 1]} : vector<160x256xf32> to vector<128x256xf32>
    %86 = arith.truncf %85 : vector<128x256xf32> to vector<128x256xbf16>
    %87 = vector.extract_strided_slice %72 {offsets = [16, 0], sizes = [128, 256], strides = [1, 1]} : vector<160x256xf32> to vector<128x256xf32>
    %88 = arith.truncf %87 : vector<128x256xf32> to vector<128x256xbf16>
    %89 = vector.extract_strided_slice %46 {offsets = [16, 0], sizes = [128, 256], strides = [1, 1]} : vector<160x256xf32> to vector<128x256xf32>
    %90 = arith.truncf %89 : vector<128x256xf32> to vector<128x256xbf16>
    %91 = vector.extract_strided_slice %80 {offsets = [16, 0], sizes = [128, 256], strides = [1, 1]} : vector<160x256xf32> to vector<128x256xf32>
    %92 = arith.truncf %91 : vector<128x256xf32> to vector<128x256xbf16>
    %93 = vector.extract_strided_slice %72 {offsets = [32, 0], sizes = [128, 256], strides = [1, 1]} : vector<160x256xf32> to vector<128x256xf32>
    %94 = arith.truncf %93 : vector<128x256xf32> to vector<128x256xbf16>
    %95 = vector.extract_strided_slice %46 {offsets = [32, 0], sizes = [128, 256], strides = [1, 1]} : vector<160x256xf32> to vector<128x256xf32>
    %96 = arith.truncf %95 : vector<128x256xf32> to vector<128x256xbf16>
    %97 = vector.extract_strided_slice %80 {offsets = [32, 0], sizes = [128, 256], strides = [1, 1]} : vector<160x256xf32> to vector<128x256xf32>
    %98 = arith.truncf %97 : vector<128x256xf32> to vector<128x256xbf16>
    %99 = tpu.concatenate %82, %84, %86, %88, %90, %92, %94, %96, %98 in 1 : vector<128x256xbf16>, vector<128x256xbf16>, vector<128x256xbf16>, vector<128x256xbf16>, vector<128x256xbf16>, vector<128x256xbf16>, vector<128x256xbf16>, vector<128x256xbf16>, vector<128x256xbf16> -> vector<128x2304xbf16>
    %c0_27 = arith.constant 0 : index
    %c0_28 = arith.constant 0 : index
    %100 = vector.load %arg6[%c0_27, %c0_28] : memref<2304x256xbf16, #tpu.memory_space<vmem>>, vector<2304x256xbf16>
    %cst_29 = arith.constant dense<0.000000e+00> : vector<128x256xf32>
    %101 = tpu.matmul %99, %100, %cst_29 {dimension_numbers = #tpu.dot_dimension_numbers<[1], [0], [0], [1], [0, 0, 1, 1], [], []>} : vector<128x2304xbf16>, vector<2304x256xbf16>, vector<128x256xf32> -> vector<128x256xf32>
    %c0_30 = arith.constant 0 : index
    %c0_31 = arith.constant 0 : index
    %102 = vector.load %arg7[%c0_30, %c0_31] : memref<1x256xf32, #tpu.memory_space<vmem>>, vector<1x256xf32>
    %103 = vector.broadcast %102 : vector<1x256xf32> to vector<128x256xf32>
    %104 = arith.addf %101, %103 : vector<128x256xf32>
    %105 = arith.truncf %104 : vector<128x256xf32> to vector<128x256xbf16>
    %c0_32 = arith.constant 0 : index
    %c0_33 = arith.constant 0 : index
    %c0_34 = arith.constant 0 : index
    %106 = vector.load %arg8[%c0_32, %c0_33, %c0_34] : memref<1x128x256xbf16, #tpu.memory_space<vmem>>, vector<1x128x256xbf16>
    %107 = vector.shape_cast %106 : vector<1x128x256xbf16> to vector<128x256xbf16>
    %108 = vector.shape_cast %105 : vector<128x256xbf16> to vector<1x128x256xbf16>
    tpu.vector_store %arg8[%c0_32, %c0_33, %c0_34], %108 {strides = array<i32>} : memref<1x128x256xbf16, #tpu.memory_space<vmem>>, vector<1x128x256xbf16>,
    %cst_35 = arith.constant dense<0.000000e+00> : vector<256xf32>
    %109 = vector.multi_reduction <add>, %104, %cst_35 [0] : vector<128x256xf32> to vector<256xf32>
    %110 = vector.shape_cast %109 : vector<256xf32> to vector<1x256xf32>
    %111 = arith.mulf %104, %104 : vector<128x256xf32>
    %cst_36 = arith.constant dense<0.000000e+00> : vector<256xf32>
    %112 = vector.multi_reduction <add>, %111, %cst_36 [0] : vector<128x256xf32> to vector<256xf32>
    %113 = vector.shape_cast %112 : vector<256xf32> to vector<1x256xf32>
    %114 = tpu.concatenate %110, %113 in 0 : vector<1x256xf32>, vector<1x256xf32> -> vector<2x256xf32>
    %c0_37 = arith.constant 0 : index
    %c0_38 = arith.constant 0 : index
    %c0_39 = arith.constant 0 : index
    %c0_40 = arith.constant 0 : index
    %115 = vector.load %arg9[%c0_37, %c0_38, %c0_39, %c0_40] : memref<1x1x2x256xf32, #tpu.memory_space<vmem>>, vector<1x1x2x256xf32>
    %116 = vector.shape_cast %115 : vector<1x1x2x256xf32> to vector<2x256xf32>
    %117 = vector.shape_cast %114 : vector<2x256xf32> to vector<1x1x2x256xf32>
    tpu.vector_store %arg9[%c0_37, %c0_38, %c0_39, %c0_40], %117 {strides = array<i32>} : memref<1x1x2x256xf32, #tpu.memory_space<vmem>>, vector<1x1x2x256xf32>,
    return
  }
  func.func @transform_0(%arg0: i32, %arg1: i32) -> (i32, i32, i32) {
    %c8_i32 = arith.constant 8 : i32
    %0 = arith.muli %arg1, %c8_i32 : i32
    %c1_i32 = arith.constant 1 : i32
    %1 = arith.subi %0, %c1_i32 : i32
    %c0_i32 = arith.constant 0 : i32
    %2 = arith.maxsi %1, %c0_i32 : i32
    %c0_i32_0 = arith.constant 0 : i32
    %c0_i32_1 = arith.constant 0 : i32
    return %arg0, %2, %c0_i32_0 : i32, i32, i32
  }
  func.func @transform_1(%arg0: i32, %arg1: i32) -> (i32, i32, i32) {
    %c0_i32 = arith.constant 0 : i32
    %c0_i32_0 = arith.constant 0 : i32
    return %arg0, %arg1, %c0_i32 : i32, i32, i32
  }
  func.func @transform_2(%arg0: i32, %arg1: i32) -> (i32, i32, i32) {
    %c1_i32 = arith.constant 1 : i32
    %0 = arith.addi %arg1, %c1_i32 : i32
    %c8_i32 = arith.constant 8 : i32
    %1 = arith.muli %0, %c8_i32 : i32
    %c7_i32 = arith.constant 7 : i32
    %2 = arith.minsi %1, %c7_i32 : i32
    %c0_i32 = arith.constant 0 : i32
    %c0_i32_0 = arith.constant 0 : i32
    return %arg0, %2, %c0_i32 : i32, i32, i32
  }
  func.func @transform_3(%arg0: i32, %arg1: i32) -> (i32, i32, i32) {
    %c0_i32 = arith.constant 0 : i32
    %c0_i32_0 = arith.constant 0 : i32
    %c0_i32_1 = arith.constant 0 : i32
    return %arg0, %c0_i32, %c0_i32_0 : i32, i32, i32
  }
  func.func @transform_4(%arg0: i32, %arg1: i32) -> (i32, i32) {
    %c0_i32 = arith.constant 0 : i32
    %c0_i32_0 = arith.constant 0 : i32
    %c0_i32_1 = arith.constant 0 : i32
    return %c0_i32, %c0_i32_0 : i32, i32
  }
  func.func @transform_5(%arg0: i32, %arg1: i32) -> (i32, i32) {
    %c0_i32 = arith.constant 0 : i32
    %c0_i32_0 = arith.constant 0 : i32
    %c0_i32_1 = arith.constant 0 : i32
    return %c0_i32, %c0_i32_0 : i32, i32
  }
  func.func @transform_6(%arg0: i32, %arg1: i32) -> (i32, i32, i32) {
    %c0_i32 = arith.constant 0 : i32
    %c0_i32_0 = arith.constant 0 : i32
    return %arg0, %arg1, %c0_i32 : i32, i32, i32
  }
  func.func @transform_7(%arg0: i32, %arg1: i32) -> (i32, i32, i32, i32) {
    %c0_i32 = arith.constant 0 : i32
    %c0_i32_0 = arith.constant 0 : i32
    %c0_i32_1 = arith.constant 0 : i32
    return %arg0, %arg1, %c0_i32, %c0_i32_0 : i32, i32, i32, i32
  }
}

</mosaic_0001>

<llo_original>
// kernel: tile.39
$region0: #{tile.39}
  %s0 = inlined_call_operand.vmem [shape: f32[8,32], index: 0, kind: input, shape index: {}]
  %s1 = inlined_call_operand.vmem [shape: f32[1,256], index: 1, kind: output, shape index: {}]
  $region1: #{tile.39} parent=0
    #allocation0 [shape = 'u8[8192]{0}', space=vmem, size = 0x2000, scoped, tag = 'scoped mem for output reshape']
    %s2 = smov 3
    %v3 = vld [vmem:[%s0] ss:$4 sm:%s2]
    %vm4 = vcmask 261120
    %5 = vst.msk [vmem:[#allocation0] ss:$8 sm:$0x3] %vm4, %v3
    %s6 = scalar_lea.vmem %s0, 3
    %s7 = smov 3
    %v8 = vld [vmem:[%s6] ss:$4 sm:%s7]
    %9 = vrot.lane.b32.xlu0 %v8, 96
    %v10 = vpop.permute.xlu0 %9
    %vm11 = vcmask 1048320
    %12 = vst.msk [vmem:[#allocation0] ss:$8 sm:$0x3] %vm11, %v10
    %s13 = scalar_lea.vmem %s0, 2
    %s14 = smov 3
    %v15 = vld [vmem:[%s13] ss:$4 sm:%s14]
    %16 = vrot.lane.b32.xlu0 %v15, 64
    %v17 = vpop.permute.xlu0 %16
    %vm18 = vcmask 785920
    %19 = vst.msk [vmem:[#allocation0] ss:$8 sm:$0x3] %vm18, %v17
    %s20 = scalar_lea.vmem %s0, 1
    %s21 = smov 3
    %v22 = vld [vmem:[%s20] ss:$4 sm:%s21]
    %23 = vrot.lane.b32.xlu0 %v22, 32
    %v24 = vpop.permute.xlu0 %23
    %vm25 = vcmask 523520
    %26 = vst.msk [vmem:[#allocation0] ss:$8 sm:$0x3] %vm25, %v24
    %s28 = sshllo.u32 0, 1
    %v30 = vld [vmem:[#allocation0] sm:%s28]
    %s31 = sshllo.u32 0, 1
    %32 = vst [vmem:[%s1] sm:%s31] %v30
    %s33 = scalar_lea.vmem [#allocation0], 8
    %v34 = vld [vmem:[%s33] sm:%s28]
    %s35 = sshllo.u32 0, 1
    %s36 = scalar_lea.vmem %s1, 1
    %37 = vst [vmem:[%s36] sm:%s35] %v34

// kernel: tile.38
$region0: #{tile.38}
  #allocation2 [shape = 's32[1]{0}', space=sflag, size = 0x4, scoped, tag = 'scoped memory for tile.38']
  %s0 = inlined_call_operand.hbm [shape: f32[32], index: 0, kind: input, shape index: {}]
  %s1 = inlined_call_operand.vmem [shape: f32[8,32], index: 1, kind: output, shape index: {}]
  $region1: #{tile.38} parent=0
    #allocation0 [shape = 'u8[512]{0}', space=vmem, size = 0x400, scoped, tag = 'operand span for operand 0']
    #allocation1 [shape = 's32[1]{0}', space=sflag, size = 0x4, scoped, tag = 'scoped memory for tile.38']
    %2 = vsyncpa [#allocation1], 0
    // Predicated region
    $region2: #{tile.38} parent=1 // pred_check
      _
    $region3: #{tile.38} parent=1 // pred_check_branch
      %4 = sbr.rel (0) target = $region5
    $region4: #{tile.38} parent=1 // pred_region
      %s6 = ssub.s32 16, 16
      %7 = vsyncadd [#allocation1], %s6
      %s9 = sshll.u32 [#allocation0], 4
      %s10 = int_to_ptr.vmem [resolvable:$true] %s9
      %12 = dma.hbm_to_vmem [thread:$0]  %s0, 16, %s10, [#allocation1]
    $region5: #{tile.38} parent=1 // pred_fallthru
      _
    // Predicated region
    $region6: #{tile.38} parent=1 // pred_check
      _
    $region7: #{tile.38} parent=1 // pred_check_branch
      %14 = sbr.rel (0) target = $region9
    $region8: #{tile.38} parent=1 // pred_region
      %15 = dma.done [#allocation1], 16
    $region9: #{tile.38} parent=1 // pred_fallthru
      _
    %v16 = vld [vmem:[#allocation0] ss:$0 sm:$0xff]
    %17 = vst [vmem:[%s1] sm:$0xff] %v16
    %18 = vsyncpa [#allocation1], 1

// kernel: squeeze.59
$region0: #{squeeze.59}
  %s0 = inlined_call_operand.vmem [shape: f32[2,256], index: 0, kind: input, shape index: {}]
  %s1 = inlined_call_operand.vmem [shape: f32[2,8,32], index: 1, kind: output, shape index: {}]
  $region1: #{squeeze.59} parent=0
    #allocation0 [shape = 'u8[8192]{0}', space=vmem, size = 0x2000, scoped, tag = 'scoped mem for input reshape']
    %s3 = sshllo.u32 0, 2
    %s4 = scalar_lea.vmem %s0, 2
    %v5 = vld [vmem:[%s4] sm:%s3]
    %s6 = scalar_lea.vmem [#allocation0], 8
    %7 = vst [vmem:[%s6] sm:%s3] %v5
    %v8 = vld [vmem:[%s0] sm:%s3]
    %9 = vst [vmem:[#allocation0] sm:%s3] %v8
    %v10 = vld [vmem:[#allocation0] sm:$0x3]
    %vm11 = vcmask 261120
    %12 = vst.msk [vmem:[%s1] ss:$8 sm:$0x3] %vm11, %v10
    %s13 = scalar_lea.vmem [#allocation0], 8
    %v14 = vld [vmem:[%s13] sm:$0x3]
    %vm15 = vcmask 261120
    %s16 = scalar_lea.vmem %s1, 4
    %17 = vst.msk [vmem:[%s16] ss:$8 sm:$0x3] %vm15, %v14
    %v18 = vld.sshfl [vmem:[#allocation0] sm:$0xff pattern:$0x99999180]
    %19 = vrot.lane.b32.xlu0 %v18, 96
    %v20 = vpop.permute.xlu0 %19
    %vm21 = vcmask 261120
    %s22 = scalar_lea.vmem %s1, 1
    %23 = vst.msk [vmem:[%s22] ss:$4 sm:$0xf] %vm21, %v20
    %v24 = vld.sshfl [vmem:[#allocation0] sm:$0xff pattern:$0x99999180]
    %25 = vrot.lane.b32.xlu0 %v24, 64
    %v26 = vpop.permute.xlu0 %25
    %vm27 = vcmask 261120
    %s28 = scalar_lea.vmem %s1, 2
    %29 = vst.msk [vmem:[%s28] ss:$4 sm:$0xf] %vm27, %v26
    %v30 = vld.sshfl [vmem:[#allocation0] sm:$0xff pattern:$0x99999180]
    %31 = vrot.lane.b32.xlu0 %v30, 32
    %v32 = vpop.permute.xlu0 %31
    %vm33 = vcmask 261120
    %s34 = scalar_lea.vmem %s1, 3
    %35 = vst.msk [vmem:[%s34] ss:$4 sm:$0xf] %vm33, %v32

</llo_original>
